<compile_context>
chip_gen: v7x
topology: tpu7x:2x2x1
jax: 0.10.0
libtpu: 0.0.40
codegen_flags: <defaults>
</compile_context>

<pallas_src>
import math

import jax
import jax.numpy as jnp
from jax.experimental import pallas as pl
from jax.experimental.pallas import tpu as pltpu

_EPS = 1e-10


def _vmem_capacity_bytes():
    """Per-core VMEM capacity; conservative (v7x) fallback if query fails."""
    try:
        info = pltpu.get_tpu_info()
        cap = getattr(info, "vmem_capacity_bytes", None)
        if cap:
            return int(cap)
    except Exception:
        pass
    return 64 * 1024 * 1024


def _choose_tile_m(n, c, in_itemsize, vmem_budget_bytes):
    """Largest multiple-of-8 row tile whose double-buffered blocks fit VMEM."""
    # Per row: logits block row + lane-padded (x128) int32 target row.
    bytes_per_row = c * in_itemsize + 128 * 4
    tm = vmem_budget_bytes // (2 * bytes_per_row)   # x2: double-buffered inputs
    tm = max(8, (tm // 8) * 8)
    tm = min(tm, 2048)          # diminishing returns beyond ~1-2k rows
    if tm >= n:
        return n                # full extent is always a legal block dim
    return tm


def _make_kernel(margin, t_logb, w_logb, n_rows, tile_m, needs_mask):
    inv_t = 1.0 / t_logb
    thresh = 1.0 / (t_logb * t_logb)   # condition on s = shifted + margin
    lin_const = -inv_t * math.log(1.0 / (t_logb * t_logb)) + inv_t

    def kernel(x_ref, tgt_ref, out_ref):
        x = x_ref[...].astype(jnp.float32)           # (TM, C)
        tgt = tgt_ref[...]                           # (TM, 1) int32

        if needs_mask:
            i = pl.program_id(0)
            row = jax.lax.broadcasted_iota(jnp.int32, (tile_m, 1), 0) + i * tile_m
            valid = row < n_rows                     # (TM, 1) bool
            x = jnp.where(valid, x, 0.0)             # keep padded rows finite
            vmaskf = valid.astype(jnp.float32)

        # ---- log-softmax pieces (keep everything in terms of `shifted`) ----
        row_max = jnp.max(x, axis=-1, keepdims=True)            # (TM, 1)
        shifted = x - row_max                                    # (TM, C)
        lse = jnp.log(jnp.sum(jnp.exp(shifted), axis=-1, keepdims=True))

        # ---- NLL: gather target shifted-logit via one-hot ----
        col = jax.lax.broadcasted_iota(jnp.int32, x.shape, 1)    # (TM, C)
        onehot = (col == tgt).astype(jnp.float32)
        tgt_shift = jnp.sum(shifted * onehot, axis=-1, keepdims=True)  # (TM,1)
        nll = lse - tgt_shift                                    # (TM, 1)

        # ---- log-barrier: z = (max - x) - margin = -(shifted + margin) ----
        s = shifted + margin                                     # = -z
        barrier = jnp.where(
            s > thresh,                                          # z < -1/t^2
            -inv_t * jnp.log(jnp.maximum(s + _EPS, _EPS)),       # NaN-safe log
            -t_logb * s + lin_const,                             # t*z + const
        )

        if needs_mask:
            nll = nll * vmaskf
            barrier = barrier * vmaskf

        ce_part = jnp.sum(nll)
        lb_part = jnp.sum(barrier)

        # Lane-dense per-tile partial-sum block: lane 0 = ce, lane 1 = barrier.
        lane = jax.lax.broadcasted_iota(jnp.int32, (1, 1, 128), 2)
        out_ref[...] = (jnp.where(lane == 0, ce_part, 0.0)
                        + jnp.where(lane == 1, lb_part, 0.0))

    return kernel


def label_smooth_constrained_loss(inputs, targets, *, margin=10.0, t_logb=10.0,
                                  w_logb=0.1, tile_m=None):
    """Returns (loss, loss_ce, loss_barrier) as float32 scalars."""
    n, c = inputs.shape
    targets2d = targets.astype(jnp.int32).reshape(n, 1)

    vmem_cap = _vmem_capacity_bytes()
    vmem_budget = int(vmem_cap * 0.75)          # headroom for compiler scratch
    if tile_m is None:
        tile_m = _choose_tile_m(n, c, inputs.dtype.itemsize, vmem_budget)
    num_tiles = -(-n // tile_m)
    needs_mask = (n % tile_m) != 0

    kernel = _make_kernel(float(margin), float(t_logb), float(w_logb),
                          n, tile_m, needs_mask)

    cost = pl.CostEstimate(
        flops=int(10 * n * c),
        transcendentals=int(2 * n * c),
        bytes_accessed=int(n * c * inputs.dtype.itemsize + n * 4
                           + num_tiles * 128 * 4),
    )

    partials = pl.pallas_call(
        kernel,
        out_shape=jax.ShapeDtypeStruct((num_tiles, 1, 128), jnp.float32),
        grid=(num_tiles,),
        in_specs=[
            pl.BlockSpec((tile_m, c), lambda i: (i, 0)),
            pl.BlockSpec((tile_m, 1), lambda i: (i, 0)),
        ],
        out_specs=pl.BlockSpec((1, 1, 128), lambda i: (i, 0, 0)),
        compiler_params=pltpu.CompilerParams(
            dimension_semantics=("parallel",),      # megacore-shardable on v7x
            vmem_limit_bytes=int(vmem_cap * 0.8),
        ),
        cost_estimate=cost,
    )(inputs, targets2d)

    # Final (tiny) reduction + weighted combine in the wrapper.
    ce = jnp.sum(partials[:, 0, 0]) / n
    lb = jnp.sum(partials[:, 0, 1]) / (n * c)
    loss = ce + w_logb * lb
    return loss, ce, lb


def _reference(inputs, targets, margin=10.0, t_logb=10.0, w_logb=0.1):
    """Pure-JAX reference mirroring the PyTorch forward."""
    logprobs = jax.nn.log_softmax(inputs, axis=-1)
    nll = -jnp.take_along_axis(logprobs, targets[:, None].astype(jnp.int32),
                               axis=-1)[:, 0]
    max_vals = jnp.max(inputs, axis=1, keepdims=True)
    abs_diffs = max_vals - inputs
    z = abs_diffs - margin
    barrier = jnp.where(
        z < -1.0 / t_logb ** 2,
        -(1.0 / t_logb) * jnp.log(-z + _EPS),
        t_logb * z - (1.0 / t_logb) * math.log(1.0 / t_logb ** 2) + 1.0 / t_logb,
    )
    data_loss = jnp.mean(nll)
    lb_loss = jnp.mean(barrier)
    return data_loss + w_logb * lb_loss, data_loss, lb_loss


if __name__ == "__main__":
    key = jax.random.PRNGKey(0)
    k_x, k_t = jax.random.split(key)

    N, C = 16, 32  # small: 16 samples, 32 classes
    inputs = jax.random.normal(k_x, (N, C), dtype=jnp.float32) * 3.0
    targets = jax.random.randint(k_t, (N,), 0, C, dtype=jnp.int32)

    loss, ce, lb = label_smooth_constrained_loss(inputs, targets)
    jax.block_until_ready((loss, ce, lb))

    ref_loss, ref_ce, ref_lb = _reference(inputs, targets)
    assert jnp.allclose(loss, ref_loss, rtol=1e-5, atol=1e-5), (loss, ref_loss)
    assert jnp.allclose(ce, ref_ce, rtol=1e-5, atol=1e-5), (ce, ref_ce)
    assert jnp.allclose(lb, ref_lb, rtol=1e-5, atol=1e-5), (lb, ref_lb)

    # Also exercise the ragged / multi-tile path (forces masking + grid > 1).
    N2, C2 = 52, 32
    k_x2, k_t2 = jax.random.split(jax.random.PRNGKey(1))
    inputs2 = jax.random.normal(k_x2, (N2, C2), dtype=jnp.float32) * 3.0
    targets2 = jax.random.randint(k_t2, (N2,), 0, C2, dtype=jnp.int32)
    out2 = label_smooth_constrained_loss(inputs2, targets2, tile_m=16)
    jax.block_until_ready(out2)
    ref2 = _reference(inputs2, targets2)
    for a, b in zip(out2, ref2):
        assert jnp.allclose(a, b, rtol=1e-5, atol=1e-5), (a, b)

    print("KERNEL_OK")
</pallas_src>

<mosaic_0001>
module attributes {stable_mosaic.version = 11 : i64} {
  func.func @kernel(%arg0: i32, %arg1: memref<16x32xf32, #tpu.memory_space<vmem>>, %arg2: memref<16x1xi32, #tpu.memory_space<vmem>>, %arg3: memref<1x1x128xf32, #tpu.memory_space<vmem>>) attributes {dimension_semantics = [#tpu.dimension_semantics<parallel>], iteration_bounds = array<i64: 1>, scalar_prefetch = 0 : i64, scratch_operands = 0 : i64, tpu.core_type = #tpu.core_type<tc>, window_params = [{transform_indices = @transform_0, window_bounds = array<i64: 16, 32>}, {transform_indices = @transform_1, window_bounds = array<i64: 16, 1>}, {transform_indices = @transform_2, window_bounds = array<i64: 1, 1, 128>}]} {
    %c0 = arith.constant 0 : index
    %c0_0 = arith.constant 0 : index
    %0 = vector.load %arg1[%c0, %c0_0] : memref<16x32xf32, #tpu.memory_space<vmem>>, vector<16x32xf32>
    %c0_1 = arith.constant 0 : index
    %c0_2 = arith.constant 0 : index
    %1 = vector.load %arg2[%c0_1, %c0_2] : memref<16x1xi32, #tpu.memory_space<vmem>>, vector<16x1xi32>
    %cst = arith.constant dense<0xFF800000> : vector<16xf32>
    %2 = vector.multi_reduction <maximumf>, %0, %cst [1] : vector<16x32xf32> to vector<16xf32>
    %3 = vector.shape_cast %2 : vector<16xf32> to vector<16x1xf32>
    %4 = vector.broadcast %3 : vector<16x1xf32> to vector<16x32xf32>
    %5 = arith.subf %0, %4 : vector<16x32xf32>
    %6 = math.exp %5 : vector<16x32xf32>
    %cst_3 = arith.constant dense<0.000000e+00> : vector<16xf32>
    %7 = vector.multi_reduction <add>, %6, %cst_3 [1] : vector<16x32xf32> to vector<16xf32>
    %8 = vector.shape_cast %7 : vector<16xf32> to vector<16x1xf32>
    %9 = math.log %8 : vector<16x1xf32>
    %10 = tpu.iota {dimensions = array<i32: 1>} : vector<16x32xi32>
    %11 = vector.broadcast %1 : vector<16x1xi32> to vector<16x32xi32>
    %12 = arith.cmpi eq, %10, %11 : vector<16x32xi32>
    %13 = arith.extui %12 : vector<16x32xi1> to vector<16x32xi32>
    %14 = arith.sitofp %13 : vector<16x32xi32> to vector<16x32xf32>
    %15 = arith.mulf %5, %14 : vector<16x32xf32>
    %cst_4 = arith.constant dense<0.000000e+00> : vector<16xf32>
    %16 = vector.multi_reduction <add>, %15, %cst_4 [1] : vector<16x32xf32> to vector<16xf32>
    %17 = vector.shape_cast %16 : vector<16xf32> to vector<16x1xf32>
    %18 = arith.subf %9, %17 : vector<16x1xf32>
    %cst_5 = arith.constant 1.000000e+01 : f32
    %19 = vector.broadcast %cst_5 : f32 to vector<16x32xf32>
    %20 = arith.addf %5, %19 : vector<16x32xf32>
    %cst_6 = arith.constant 0.00999999977 : f32
    %21 = vector.broadcast %cst_6 : f32 to vector<16x32xf32>
    %22 = arith.cmpf ogt, %20, %21 : vector<16x32xf32>
    %cst_7 = arith.constant 1.000000e-10 : f32
    %23 = vector.broadcast %cst_7 : f32 to vector<16x32xf32>
    %24 = arith.addf %20, %23 : vector<16x32xf32>
    %cst_8 = arith.constant 1.000000e-10 : f32
    %25 = vector.broadcast %cst_8 : f32 to vector<16x32xf32>
    %26 = arith.maximumf %24, %25 : vector<16x32xf32>
    %27 = math.log %26 : vector<16x32xf32>
    %cst_9 = arith.constant -1.000000e-01 : f32
    %28 = vector.broadcast %cst_9 : f32 to vector<16x32xf32>
    %29 = arith.mulf %28, %27 : vector<16x32xf32>
    %cst_10 = arith.constant -1.000000e+01 : f32
    %30 = vector.broadcast %cst_10 : f32 to vector<16x32xf32>
    %31 = arith.mulf %30, %20 : vector<16x32xf32>
    %cst_11 = arith.constant 5.605170e-01 : f32
    %32 = vector.broadcast %cst_11 : f32 to vector<16x32xf32>
    %33 = arith.addf %31, %32 : vector<16x32xf32>
    %34 = arith.select %22, %29, %33 : vector<16x32xi1>, vector<16x32xf32>
    %35 = vector.shape_cast %18 : vector<16x1xf32> to vector<1x16x1xf32>
    %cst_12 = arith.constant dense<0.000000e+00> : vector<1xf32>
    %36 = vector.multi_reduction <add>, %35, %cst_12 [1, 2] : vector<1x16x1xf32> to vector<1xf32>
    %37 = vector.shape_cast %36 : vector<1xf32> to vector<1x1x1xf32>
    %38 = vector.extract %37[0, 0, 0] : f32 from vector<1x1x1xf32>
    %39 = vector.shape_cast %34 : vector<16x32xf32> to vector<1x16x32xf32>
    %cst_13 = arith.constant dense<0.000000e+00> : vector<1xf32>
    %40 = vector.multi_reduction <add>, %39, %cst_13 [1, 2] : vector<1x16x32xf32> to vector<1xf32>
    %41 = vector.shape_cast %40 : vector<1xf32> to vector<1x1x1xf32>
    %42 = vector.extract %41[0, 0, 0] : f32 from vector<1x1x1xf32>
    %43 = tpu.iota {dimensions = array<i32: 2>} : vector<1x1x128xi32>
    %c0_i32 = arith.constant 0 : i32
    %44 = vector.broadcast %c0_i32 : i32 to vector<1x1x128xi32>
    %45 = arith.cmpi eq, %43, %44 : vector<1x1x128xi32>
    %cst_14 = arith.constant 0.000000e+00 : f32
    %46 = vector.broadcast %38 : f32 to vector<1x1x128xf32>
    %47 = vector.broadcast %cst_14 : f32 to vector<1x1x128xf32>
    %48 = arith.select %45, %46, %47 : vector<1x1x128xi1>, vector<1x1x128xf32>
    %c1_i32 = arith.constant 1 : i32
    %49 = vector.broadcast %c1_i32 : i32 to vector<1x1x128xi32>
    %50 = arith.cmpi eq, %43, %49 : vector<1x1x128xi32>
    %cst_15 = arith.constant 0.000000e+00 : f32
    %51 = vector.broadcast %42 : f32 to vector<1x1x128xf32>
    %52 = vector.broadcast %cst_15 : f32 to vector<1x1x128xf32>
    %53 = arith.select %50, %51, %52 : vector<1x1x128xi1>, vector<1x1x128xf32>
    %54 = arith.addf %48, %53 : vector<1x1x128xf32>
    %c0_16 = arith.constant 0 : index
    %c0_17 = arith.constant 0 : index
    %c0_18 = arith.constant 0 : index
    %55 = vector.load %arg3[%c0_16, %c0_17, %c0_18] : memref<1x1x128xf32, #tpu.memory_space<vmem>>, vector<1x1x128xf32>
    tpu.vector_store %arg3[%c0_16, %c0_17, %c0_18], %54 {strides = array<i32>} : memref<1x1x128xf32, #tpu.memory_space<vmem>>, vector<1x1x128xf32>,
    return
  }
  func.func @transform_0(%arg0: i32) -> (i32, i32) {
    %c0_i32 = arith.constant 0 : i32
    %c0_i32_0 = arith.constant 0 : i32
    return %arg0, %c0_i32 : i32, i32
  }
  func.func @transform_1(%arg0: i32) -> (i32, i32) {
    %c0_i32 = arith.constant 0 : i32
    %c0_i32_0 = arith.constant 0 : i32
    return %arg0, %c0_i32 : i32, i32
  }
  func.func @transform_2(%arg0: i32) -> (i32, i32, i32) {
    %c0_i32 = arith.constant 0 : i32
    %c0_i32_0 = arith.constant 0 : i32
    %c0_i32_1 = arith.constant 0 : i32
    return %arg0, %c0_i32, %c0_i32_0 : i32, i32, i32
  }
}

</mosaic_0001>

<llo_original>
// kernel: tpu_custom_call.1
$region0: #{tpu_custom_call.1}
  #allocation0 [shape = 'u32[]', space=smem, size = 0x4, offset = 0x4, fixed_abs, tag = 'smem constant byte address 0x4 - core index']
  #allocation1 [shape = 'u32[144,128]{1,0:T(1,128)}', space=vmem, size = 0x12000, scoped, tag = 'internal scratch']
  %s0 = inlined_call_operand.vmem [shape: f32[16,32], index: 0, kind: input, shape index: {}]
  %s1 = inlined_call_operand.vmem [shape: s32[16,1], index: 1, kind: input, shape index: {}]
  %s2 = inlined_call_operand.hbm [shape: f32[1,1,128], index: 2, kind: output, shape index: {}]
  %s3 = sld [smem:[#allocation0]]
  $region18: #{tpu_custom_call.1} parent=0
    _
  %s5 = ssub.s32 1, %s3
  %s6 = scalar_select 0, %s5, %s3
  $region1: #{tpu_custom_call.1} parent=0
    #allocation2 [shape = 'u8[512]{0}', space=vmem, size = 0x400, scoped, tag = 'output window, operand 0, single buffered']
    #allocation3 [shape = 's32[1]{0}', space=sflag, size = 0x4, scoped, tag = 'scoped memory for tpu_custom_call.1']
    %7 = vsyncpa [#allocation3], 0
    // Predicated region
    $region2: #{tpu_custom_call.1} parent=1 // pred_check
      _
    $region3: #{tpu_custom_call.1} parent=1 // pred_check_branch
      %9 = sbr.rel (0) target = $region5
    $region4: #{tpu_custom_call.1} parent=1 // pred_region
      _
    $region5: #{tpu_custom_call.1} parent=1 // pred_fallthru
      _
    // Predicated region
    $region6: #{tpu_custom_call.1} parent=1 // pred_check
      _
    $region7: #{tpu_custom_call.1} parent=1 // pred_check_branch
      %11 = sbr.rel (0) target = $region9
    $region8: #{tpu_custom_call.1} parent=1 // pred_region
      _
    $region9: #{tpu_custom_call.1} parent=1 // pred_fallthru
      _
    %v12 = vld [vmem:[%s0] sm:$0xff]
    %v13 = vld [vmem:[%s0 + $0x8] sm:$0xff]
    %v14 = vld [vmem:[%s1] sm:$0xff]
    %v15 = vld [vmem:[%s1 + $0x8] sm:$0xff]
    %vm16 = vcmask 261120
    %v17 = vsel %vm16, %v12, -inf
    %18 = vmax.xlane.f32.xlu0 %v17
    %v19 = vpop.xlane.xlu0 %18
    %v20 = vsel %vm16, %v13, -inf
    %21 = vmax.xlane.f32.xlu0 %v20
    %v22 = vpop.xlane.xlu0 %21
    %v23 = vsub.f32 %v12, %v19
    %v24 = vsub.f32 %v13, %v22
    %v25 = vmul.f32 %v23, 1.442695
    %v26 = vpow.pop %v25
    %v27 = vmul.f32 %v24, 1.442695
    %v28 = vpow.pop %v27
    %v29 = vsel %vm16, %v26, 0.0
    %30 = vadd.xlane.f32.xlu0 %v29
    %v31 = vpop.xlane.xlu0 %30
    %v32 = vsel %vm16, %v28, 0.0
    %33 = vadd.xlane.f32.xlu0 %v32
    %v34 = vpop.xlane.xlu0 %33
    %v35 = vlog2.pop %v31
    %v36 = vmul.f32 %v35, 0.6931472
    %v37 = vlog2.pop %v34
    %v38 = vmul.f32 %v37, 0.6931472
    %v39 = vlaneseq
    %v40 = vand.u32 %v39, 127
    %41 = vset.pattern.permute.xlu0 0
    %42 = vperm.xlu0 %41, %v14
    %v43 = vpop.permute.xlu0 %42
    %44 = vset.pattern.permute.xlu0 0
    %45 = vperm.xlu0 %44, %v15
    %v46 = vpop.permute.xlu0 %45
    %vm47 = vcmp.eq.s32.totalorder %v40, %v43
    %vm48 = vcmp.eq.s32.totalorder %v40, %v46
    %v49 = vsel %vm47, 1, 0
    %v50 = vsel %vm48, 1, 0
    %v51 = vcvt.s32.f32 %v49
    %v52 = vcvt.s32.f32 %v50
    %v53 = vmul.f32 %v23, %v51
    %v54 = vmul.f32 %v24, %v52
    %v55 = vsel %vm16, %v53, 0.0
    %56 = vadd.xlane.f32.xlu0 %v55
    %v57 = vpop.xlane.xlu0 %56
    %v58 = vsel %vm16, %v54, 0.0
    %59 = vadd.xlane.f32.xlu0 %v58
    %v60 = vpop.xlane.xlu0 %59
    %v61 = vsub.f32 %v36, %v57
    %v62 = vsub.f32 %v38, %v60
    %v63 = vadd.f32 %v23, 10.0
    %v64 = vadd.f32 %v24, 10.0
    %vm65 = vcmp.gt.f32.partialorder %v63, 0.01
    %vm66 = vcmp.gt.f32.partialorder %v64, 0.01
    %v67 = vadd.f32 %v63, 1e-10
    %v68 = vadd.f32 %v64, 1e-10
    %v69 = vmax.f32 %v67, 1e-10
    %v70 = vmax.f32 %v68, 1e-10
    %v71 = vlog2.pop %v69
    %v72 = vmul.f32 %v71, 0.6931472
    %v73 = vlog2.pop %v70
    %v74 = vmul.f32 %v73, 0.6931472
    %v75 = vmul.f32 %v72, -0.1
    %v76 = vmul.f32 %v74, -0.1
    %v77 = vmul.f32 %v63, -10.0
    %v78 = vmul.f32 %v64, -10.0
    %v79 = vadd.f32 %v77, 0.560517
    %v80 = vadd.f32 %v78, 0.560517
    %v81 = vsel %vm65, %v75, %v79
    %v82 = vsel %vm66, %v76, %v80
    %vm83 = vcmask 7168
    %v84 = vsel %vm83, %v61, 0.0
    %v85 = vsel %vm83, %v62, 0.0
    %v86 = vadd.f32 %v84, %v85
    %87 = vadd.xlane.f32.xlu0 %v86
    %v88 = vpop.xlane.xlu0 %87
    %v89 = vrot.slane %v88, 4
    %v90 = vadd.f32 %v88, %v89
    %v91 = vrot.slane %v90, 2
    %v92 = vadd.f32 %v90, %v91
    %v93 = vrot.slane %v92, 1
    %v94 = vadd.f32 %v92, %v93
    %s95 = vtos %v94
    %v96 = vsel %vm16, %v81, 0.0
    %v97 = vsel %vm16, %v82, 0.0
    %v98 = vadd.f32 %v96, %v97
    %99 = vadd.xlane.f32.xlu0 %v98
    %v100 = vpop.xlane.xlu0 %99
    %v101 = vrot.slane %v100, 4
    %v102 = vadd.f32 %v100, %v101
    %v103 = vrot.slane %v102, 2
    %v104 = vadd.f32 %v102, %v103
    %v105 = vrot.slane %v104, 1
    %v106 = vadd.f32 %v104, %v105
    %s107 = vtos %v106
    %vm108 = vcmp.eq.s32.totalorder %v40, 0
    %v109 = vstv %s95
    %v110 = vsel %vm108, %v109, 0.0
    %vm111 = vcmp.eq.s32.totalorder %v40, 1
    %v112 = vstv %s107
    %v113 = vsel %vm111, %v112, 0.0
    %v114 = vadd.f32 %v110, %v113
    %115 = vst [vmem:[#allocation2] sm:$0x1] %v114
    // Predicated region
    $region10: #{tpu_custom_call.1} parent=1 // pred_check
      _
    $region11: #{tpu_custom_call.1} parent=1 // pred_check_branch
      %117 = sbr.rel (0) target = $region13
    $region12: #{tpu_custom_call.1} parent=1 // pred_region
      %s119 = ssub.s32 16, 16
      %120 = vsyncadd [#allocation3], %s119
      %s122 = sshll.u32 [#allocation2], 4
      %s123 = int_to_ptr.vmem [resolvable:$true] %s122
      %125 = dma.vmem_to_hbm [thread:$0]  %s123, 16, %s2, [#allocation3]
    $region13: #{tpu_custom_call.1} parent=1 // pred_fallthru
      _
    // Predicated region
    $region14: #{tpu_custom_call.1} parent=1 // pred_check
      _
    $region15: #{tpu_custom_call.1} parent=1 // pred_check_branch
      %127 = sbr.rel (0) target = $region17
    $region16: #{tpu_custom_call.1} parent=1 // pred_region
      %128 = dma.done [#allocation3], 16
    $region17: #{tpu_custom_call.1} parent=1 // pred_fallthru
      _
    %129 = vsyncpa [#allocation3], 1

</llo_original>
